<compile_context>
chip_gen: v5e
topology: v5e:2x2
jax: 0.10.0
libtpu: 0.0.40
codegen_flags: <defaults>
</compile_context>

<pallas_src>
import functools

import jax
import jax.numpy as jnp
from jax.experimental import pallas as pl
from jax.experimental.pallas import tpu as pltpu


def _round_up(n: int, m: int) -> int:
    return ((n + m - 1) // m) * m


def mlp_kernel(x_ref, w1_ref, b1_ref, w2_ref, b2_ref, w3_ref, b3_ref, o_ref):
    """x: (tile_b, in) f32; weights (in,out) f32; biases (1,out) f32; out f32."""
    # Layer 1: x @ W1 + b1, ReLU  (MXU matmul, f32 accumulation)
    h1 = jnp.dot(x_ref[...], w1_ref[...], preferred_element_type=jnp.float32)
    h1 = jnp.maximum(h1 + b1_ref[...], 0.0)
    # Layer 2: h1 @ W2 + b2, ReLU
    h2 = jnp.dot(h1, w2_ref[...], preferred_element_type=jnp.float32)
    h2 = jnp.maximum(h2 + b2_ref[...], 0.0)
    # Layer 3: h2 @ W3 + b3 (no activation); narrow (16-wide) f32 store.
    o_ref[...] = (
        jnp.dot(h2, w3_ref[...], preferred_element_type=jnp.float32) + b3_ref[...]
    )


def prepare_params(w1, b1, w2, b2, w3, b3):
    """Weights stored as (in, out) so the kernel computes x @ W (== x @ W.T of
    PyTorch's (out, in) storage).  Everything stays f32; biases are (1, out)."""
    return {
        "w1": jnp.asarray(w1, jnp.float32),
        "b1": jnp.asarray(b1, jnp.float32).reshape(1, -1),
        "w2": jnp.asarray(w2, jnp.float32),
        "b2": jnp.asarray(b2, jnp.float32).reshape(1, -1),
        "w3": jnp.asarray(w3, jnp.float32),
        "b3": jnp.asarray(b3, jnp.float32).reshape(1, -1),
    }


def _choose_tiling(batch: int, max_tile_b: int, min_steps: int = 2):
    """Pick (tile_b, b_pad, n_steps): tile_b multiple of 16, <= max_tile_b,
    padding waste bounded, and >=2 grid steps when the batch is big enough so
    both v7x TensorCores participate."""
    b16 = _round_up(max(batch, 1), 16)
    n_steps = max(-(-b16 // max_tile_b), 1)      # steps forced by the tile cap
    if b16 >= 32:
        n_steps = max(n_steps, min_steps)        # give both TCs work on v7x
    tile_b = _round_up(-(-b16 // n_steps), 16)
    b_pad = n_steps * tile_b
    return tile_b, b_pad, n_steps


@functools.partial(jax.jit, static_argnames=("max_tile_b",))
def ournet_forward(x, params, *, max_tile_b: int = 1024):
    """x: (B, input_size) float32. params: output of prepare_params."""
    B, in_size = x.shape
    out_size = params["w3"].shape[1]
    h1_size = params["w1"].shape[1]
    h2_size = params["w2"].shape[1]

    tile_b, b_pad, n_steps = _choose_tiling(B, max_tile_b)

    # Only pad batch rows (zeros) when needed; no column pad, no dtype cast.
    x_in = x if b_pad == B else jnp.pad(x, ((0, b_pad - B), (0, 0)))

    out = pl.pallas_call(
        mlp_kernel,
        out_shape=jax.ShapeDtypeStruct((b_pad, out_size), jnp.float32),
        grid=(n_steps,),
        in_specs=[
            # Streamed, double-buffered batch tiles of raw x (last dim = full).
            pl.BlockSpec((tile_b, in_size), lambda i: (i, 0)),
            # Weights / biases: constant index_map -> resident, DMA'd once.
            pl.BlockSpec((in_size, h1_size), lambda i: (0, 0)),
            pl.BlockSpec((1, h1_size), lambda i: (0, 0)),
            pl.BlockSpec((h1_size, h2_size), lambda i: (0, 0)),
            pl.BlockSpec((1, h2_size), lambda i: (0, 0)),
            pl.BlockSpec((h2_size, out_size), lambda i: (0, 0)),
            pl.BlockSpec((1, out_size), lambda i: (0, 0)),
        ],
        out_specs=pl.BlockSpec((tile_b, out_size), lambda i: (i, 0)),
        compiler_params=pltpu.CompilerParams(
            dimension_semantics=("parallel",),  # batch axis shards across TCs on v7x
        ),
    )(x_in, params["w1"], params["b1"], params["w2"], params["b2"],
      params["w3"], params["b3"])

    # Drop batch padding (no column padding exists).
    return out if b_pad == B else out[:B]


def init_params(key, input_size, hidden1, hidden2, output_size):
    """Deterministic init mimicking nn.Linear's uniform(-1/sqrt(in), 1/sqrt(in))."""
    ks = jax.random.split(key, 6)

    def linear(kw, kb, fan_in, fan_out):
        bound = 1.0 / jnp.sqrt(fan_in)
        w = jax.random.uniform(kw, (fan_in, fan_out), jnp.float32, -bound, bound)
        b = jax.random.uniform(kb, (1, fan_out), jnp.float32, -bound, bound)
        return w, b

    w1, b1 = linear(ks[0], ks[1], input_size, hidden1)
    w2, b2 = linear(ks[2], ks[3], hidden1, hidden2)
    w3, b3 = linear(ks[4], ks[5], hidden2, output_size)
    return w1, b1, w2, b2, w3, b3


if __name__ == "__main__":
    # Small shapes consistent with the module: batch=8, input=32, h1=64, h2=64, out=16
    batch, input_size, hidden1, hidden2, output_size = 8, 32, 64, 64, 16

    key = jax.random.PRNGKey(0)
    kx, kp = jax.random.split(key)
    x = jax.random.normal(kx, (batch, input_size), jnp.float32)
    w1, b1, w2, b2, w3, b3 = init_params(kp, input_size, hidden1, hidden2,
                                         output_size)

    params = prepare_params(w1, b1, w2, b2, w3, b3)
    out = ournet_forward(x, params)
    out = jax.block_until_ready(out)

    # Pure-JAX f32 reference (same math as the PyTorch module).
    ref = jnp.maximum(x @ w1 + b1, 0.0)
    ref = jnp.maximum(ref @ w2 + b2, 0.0)
    ref = ref @ w3 + b3

    assert out.shape == (batch, output_size)
    assert jnp.allclose(out, ref, atol=2e-2, rtol=2e-2), "mismatch vs reference"

    print("KERNEL_OK")
</pallas_src>

<mosaic_0001>
module attributes {stable_mosaic.version = 11 : i64} {
  func.func @mlp_kernel(%arg0: i32, %arg1: memref<16x32xf32, #tpu.memory_space<vmem>>, %arg2: memref<32x64xf32, #tpu.memory_space<vmem>>, %arg3: memref<1x64xf32, #tpu.memory_space<vmem>>, %arg4: memref<64x64xf32, #tpu.memory_space<vmem>>, %arg5: memref<1x64xf32, #tpu.memory_space<vmem>>, %arg6: memref<64x16xf32, #tpu.memory_space<vmem>>, %arg7: memref<1x16xf32, #tpu.memory_space<vmem>>, %arg8: memref<16x16xf32, #tpu.memory_space<vmem>>) attributes {dimension_semantics = [#tpu.dimension_semantics<parallel>], iteration_bounds = array<i64: 1>, scalar_prefetch = 0 : i64, scratch_operands = 0 : i64, tpu.core_type = #tpu.core_type<tc>, window_params = [{transform_indices = @transform_0, window_bounds = array<i64: 16, 32>}, {pipeline_mode = #tpu.pipeline_mode<synchronous>, transform_indices = @transform_1, window_bounds = array<i64: 32, 64>}, {pipeline_mode = #tpu.pipeline_mode<synchronous>, transform_indices = @transform_2, window_bounds = array<i64: 1, 64>}, {pipeline_mode = #tpu.pipeline_mode<synchronous>, transform_indices = @transform_3, window_bounds = array<i64: 64, 64>}, {pipeline_mode = #tpu.pipeline_mode<synchronous>, transform_indices = @transform_4, window_bounds = array<i64: 1, 64>}, {pipeline_mode = #tpu.pipeline_mode<synchronous>, transform_indices = @transform_5, window_bounds = array<i64: 64, 16>}, {pipeline_mode = #tpu.pipeline_mode<synchronous>, transform_indices = @transform_6, window_bounds = array<i64: 1, 16>}, {transform_indices = @transform_7, window_bounds = array<i64: 16, 16>}]} {
    %c0 = arith.constant 0 : index
    %c0_0 = arith.constant 0 : index
    %0 = vector.load %arg1[%c0, %c0_0] : memref<16x32xf32, #tpu.memory_space<vmem>>, vector<16x32xf32>
    %c0_1 = arith.constant 0 : index
    %c0_2 = arith.constant 0 : index
    %1 = vector.load %arg2[%c0_1, %c0_2] : memref<32x64xf32, #tpu.memory_space<vmem>>, vector<32x64xf32>
    %cst = arith.constant dense<0.000000e+00> : vector<16x64xf32>
    %2 = tpu.matmul %0, %1, %cst {dimension_numbers = #tpu.dot_dimension_numbers<[1], [0], [0], [1], [0, 0, 1, 1], [], []>} : vector<16x32xf32>, vector<32x64xf32>, vector<16x64xf32> -> vector<16x64xf32>
    %c0_3 = arith.constant 0 : index
    %c0_4 = arith.constant 0 : index
    %3 = vector.load %arg3[%c0_3, %c0_4] : memref<1x64xf32, #tpu.memory_space<vmem>>, vector<1x64xf32>
    %4 = vector.broadcast %3 : vector<1x64xf32> to vector<16x64xf32>
    %5 = arith.addf %2, %4 : vector<16x64xf32>
    %cst_5 = arith.constant 0.000000e+00 : f32
    %6 = vector.broadcast %cst_5 : f32 to vector<16x64xf32>
    %7 = arith.maximumf %5, %6 : vector<16x64xf32>
    %c0_6 = arith.constant 0 : index
    %c0_7 = arith.constant 0 : index
    %8 = vector.load %arg4[%c0_6, %c0_7] : memref<64x64xf32, #tpu.memory_space<vmem>>, vector<64x64xf32>
    %cst_8 = arith.constant dense<0.000000e+00> : vector<16x64xf32>
    %9 = tpu.matmul %7, %8, %cst_8 {dimension_numbers = #tpu.dot_dimension_numbers<[1], [0], [0], [1], [0, 0, 1, 1], [], []>} : vector<16x64xf32>, vector<64x64xf32>, vector<16x64xf32> -> vector<16x64xf32>
    %c0_9 = arith.constant 0 : index
    %c0_10 = arith.constant 0 : index
    %10 = vector.load %arg5[%c0_9, %c0_10] : memref<1x64xf32, #tpu.memory_space<vmem>>, vector<1x64xf32>
    %11 = vector.broadcast %10 : vector<1x64xf32> to vector<16x64xf32>
    %12 = arith.addf %9, %11 : vector<16x64xf32>
    %cst_11 = arith.constant 0.000000e+00 : f32
    %13 = vector.broadcast %cst_11 : f32 to vector<16x64xf32>
    %14 = arith.maximumf %12, %13 : vector<16x64xf32>
    %c0_12 = arith.constant 0 : index
    %c0_13 = arith.constant 0 : index
    %15 = vector.load %arg6[%c0_12, %c0_13] : memref<64x16xf32, #tpu.memory_space<vmem>>, vector<64x16xf32>
    %cst_14 = arith.constant dense<0.000000e+00> : vector<16x16xf32>
    %16 = tpu.matmul %14, %15, %cst_14 {dimension_numbers = #tpu.dot_dimension_numbers<[1], [0], [0], [1], [0, 0, 1, 1], [], []>} : vector<16x64xf32>, vector<64x16xf32>, vector<16x16xf32> -> vector<16x16xf32>
    %c0_15 = arith.constant 0 : index
    %c0_16 = arith.constant 0 : index
    %17 = vector.load %arg7[%c0_15, %c0_16] : memref<1x16xf32, #tpu.memory_space<vmem>>, vector<1x16xf32>
    %18 = vector.broadcast %17 : vector<1x16xf32> to vector<16x16xf32>
    %19 = arith.addf %16, %18 : vector<16x16xf32>
    %c0_17 = arith.constant 0 : index
    %c0_18 = arith.constant 0 : index
    %20 = vector.load %arg8[%c0_17, %c0_18] : memref<16x16xf32, #tpu.memory_space<vmem>>, vector<16x16xf32>
    tpu.vector_store %arg8[%c0_17, %c0_18], %19 {strides = array<i32>} : memref<16x16xf32, #tpu.memory_space<vmem>>, vector<16x16xf32>,
    return
  }
  func.func @transform_0(%arg0: i32) -> (i32, i32) {
    %c0_i32 = arith.constant 0 : i32
    %c0_i32_0 = arith.constant 0 : i32
    return %arg0, %c0_i32 : i32, i32
  }
  func.func @transform_1(%arg0: i32) -> (i32, i32) {
    %c0_i32 = arith.constant 0 : i32
    %c0_i32_0 = arith.constant 0 : i32
    %c0_i32_1 = arith.constant 0 : i32
    return %c0_i32, %c0_i32_0 : i32, i32
  }
  func.func @transform_2(%arg0: i32) -> (i32, i32) {
    %c0_i32 = arith.constant 0 : i32
    %c0_i32_0 = arith.constant 0 : i32
    %c0_i32_1 = arith.constant 0 : i32
    return %c0_i32, %c0_i32_0 : i32, i32
  }
  func.func @transform_3(%arg0: i32) -> (i32, i32) {
    %c0_i32 = arith.constant 0 : i32
    %c0_i32_0 = arith.constant 0 : i32
    %c0_i32_1 = arith.constant 0 : i32
    return %c0_i32, %c0_i32_0 : i32, i32
  }
  func.func @transform_4(%arg0: i32) -> (i32, i32) {
    %c0_i32 = arith.constant 0 : i32
    %c0_i32_0 = arith.constant 0 : i32
    %c0_i32_1 = arith.constant 0 : i32
    return %c0_i32, %c0_i32_0 : i32, i32
  }
  func.func @transform_5(%arg0: i32) -> (i32, i32) {
    %c0_i32 = arith.constant 0 : i32
    %c0_i32_0 = arith.constant 0 : i32
    %c0_i32_1 = arith.constant 0 : i32
    return %c0_i32, %c0_i32_0 : i32, i32
  }
  func.func @transform_6(%arg0: i32) -> (i32, i32) {
    %c0_i32 = arith.constant 0 : i32
    %c0_i32_0 = arith.constant 0 : i32
    %c0_i32_1 = arith.constant 0 : i32
    return %c0_i32, %c0_i32_0 : i32, i32
  }
  func.func @transform_7(%arg0: i32) -> (i32, i32) {
    %c0_i32 = arith.constant 0 : i32
    %c0_i32_0 = arith.constant 0 : i32
    return %arg0, %c0_i32 : i32, i32
  }
}

</mosaic_0001>

<llo_original>
// kernel: ournet_forward.1
$region0: #{ournet_forward.1}
  #allocation0 [shape = 'u32[]', space=smem, size = 0x4, offset = 0x4, fixed_abs, tag = 'smem constant byte address 0x4 - core index']
  #allocation1 [shape = 'u32[72,128]{1,0:T(1,128)}', space=vmem, size = 0x9000, scoped, tag = 'internal scratch']
  %s0 = inlined_call_operand.vmem [shape: f32[16,32], index: 0, kind: input, shape index: {}]
  %s1 = inlined_call_operand.hbm [shape: f32[32,64], index: 1, kind: input, shape index: {}]
  %s2 = inlined_call_operand.vmem [shape: f32[1,64], index: 2, kind: input, shape index: {}]
  %s3 = inlined_call_operand.vmem [shape: f32[64,64], index: 3, kind: input, shape index: {}]
  %s4 = inlined_call_operand.vmem [shape: f32[1,64], index: 4, kind: input, shape index: {}]
  %s5 = inlined_call_operand.vmem [shape: f32[64,16], index: 5, kind: input, shape index: {}]
  %s6 = inlined_call_operand.vmem [shape: f32[1,16], index: 6, kind: input, shape index: {}]
  %s7 = inlined_call_operand.vmem [shape: f32[16,16], index: 7, kind: output, shape index: {}]
  %s8 = sld [smem:[#allocation0]]
  $region42: #{ournet_forward.1} parent=0
    _
  %s10 = ssub.s32 1, %s8
  %s11 = scalar_select 0, %s10, %s8
  $region1: #{ournet_forward.1} parent=0
    #allocation2 [shape = 'u8[16384]{0}', space=vmem, size = 0x4000, scoped, tag = 'input window, operand 1, single buffered']
    #allocation3 [shape = 's32[1]{0}', space=sflag, size = 0x4, scoped, tag = 'scoped memory for ournet_forward.1']
    %12 = vsyncpa [#allocation3], 0
    // Predicated region
    $region2: #{ournet_forward.1} parent=1 // pred_check
      _
    $region3: #{ournet_forward.1} parent=1 // pred_check_branch
      %14 = sbr.rel (0) target = $region5
    $region4: #{ournet_forward.1} parent=1 // pred_region
      _
    $region5: #{ournet_forward.1} parent=1 // pred_fallthru
      _
    // Predicated region
    $region6: #{ournet_forward.1} parent=1 // pred_check
      _
    $region7: #{ournet_forward.1} parent=1 // pred_check_branch
      %16 = sbr.rel (0) target = $region9
    $region8: #{ournet_forward.1} parent=1 // pred_region
      %18 = vsyncadd [#allocation3], 0
      %s19 = sshll.u32 %s1, 4
      %s20 = int_to_ptr.hbm [resolvable:$true] %s19
      %s21 = sshll.u32 [#allocation2], 4
      %s22 = int_to_ptr.vmem [resolvable:$true] %s21
      %27 = dma.hbm_to_vmem [thread:$0]  %s20, 512, %s22, [#allocation3], 128, 128, 8
    $region9: #{ournet_forward.1} parent=1 // pred_fallthru
      _
    // Predicated region
    $region10: #{ournet_forward.1} parent=1 // pred_check
      _
    $region11: #{ournet_forward.1} parent=1 // pred_check_branch
      %29 = sbr.rel (0) target = $region13
    $region12: #{ournet_forward.1} parent=1 // pred_region
      _
    $region13: #{ournet_forward.1} parent=1 // pred_fallthru
      _
    // Predicated region
    $region14: #{ournet_forward.1} parent=1 // pred_check
      _
    $region15: #{ournet_forward.1} parent=1 // pred_check_branch
      %31 = sbr.rel (0) target = $region17
    $region16: #{ournet_forward.1} parent=1 // pred_region
      _
    $region17: #{ournet_forward.1} parent=1 // pred_fallthru
      _
    // Predicated region
    $region18: #{ournet_forward.1} parent=1 // pred_check
      _
    $region19: #{ournet_forward.1} parent=1 // pred_check_branch
      %33 = sbr.rel (0) target = $region21
    $region20: #{ournet_forward.1} parent=1 // pred_region
      _
    $region21: #{ournet_forward.1} parent=1 // pred_fallthru
      _
    // Predicated region
    $region22: #{ournet_forward.1} parent=1 // pred_check
      _
    $region23: #{ournet_forward.1} parent=1 // pred_check_branch
      %35 = sbr.rel (0) target = $region25
    $region24: #{ournet_forward.1} parent=1 // pred_region
      _
    $region25: #{ournet_forward.1} parent=1 // pred_fallthru
      _
    // Predicated region
    $region26: #{ournet_forward.1} parent=1 // pred_check
      _
    $region27: #{ournet_forward.1} parent=1 // pred_check_branch
      %37 = sbr.rel (0) target = $region29
    $region28: #{ournet_forward.1} parent=1 // pred_region
      _
    $region29: #{ournet_forward.1} parent=1 // pred_fallthru
      _
    // Predicated region
    $region30: #{ournet_forward.1} parent=1 // pred_check
      _
    $region31: #{ournet_forward.1} parent=1 // pred_check_branch
      %39 = sbr.rel (0) target = $region33
    $region32: #{ournet_forward.1} parent=1 // pred_region
      %41 = dma.done [#allocation3], 512
    $region33: #{ournet_forward.1} parent=1 // pred_fallthru
      _
    %v42 = vld [vmem:[%s0] sm:$0xff]
    %v43 = vld [vmem:[%s0 + $0x8] sm:$0xff]
    %v44 = vld [vmem:[#allocation2] sm:$0xff]
    %v45 = vld [vmem:[#allocation2 + $0x8] sm:$0xff]
    %v46 = vld [vmem:[#allocation2 + $0x10] sm:$0xff]
    %v47 = vld [vmem:[#allocation2 + $0x18] sm:$0xff]
    %v48 = vld [vmem:[%s2] sm:$0x1]
    %v50 = vperm.slane %v48, 0
    %vm52 = vcmask 261120
    %v54 = vsel %vm52, %v42, 0
    %v57 = vsel %vm52, %v43, 0
    %59 = vmatpush.msra.mxu0 0.0
    %60 = vmatpush.msra.mxu0 0.0
    %61 = vmatpush.msra.mxu0 0.0
    %62 = vmatpush.msra.mxu0 0.0
    %63 = vmatpush.msra.mxu0 0.0
    %64 = vmatpush.msra.mxu0 0.0
    %65 = vmatpush.msra.mxu0 0.0
    %66 = vmatpush.msra.mxu0 0.0
    %67 = vmatpush.msra.mxu0 0.0
    %68 = vmatpush.msra.mxu0 0.0
    %69 = vmatpush.msra.mxu0 0.0
    %70 = vmatpush.msra.mxu0 0.0
    %71 = vmatpush.msra.mxu0 %v47
    %72 = vmatpush.msra.mxu0 %v46
    %73 = vmatpush.msra.mxu0 %v45
    %74 = vmatpush.msra.mxu0 %v44
    %75 = vmatmul.f32.gmra.mxu0 %v54
    %v76 = vpop.f32.mrf.mxu0
    %v77 = vadd.f32 %v50, %v76
    %78 = vmatmul.f32.gmra.mxu0 %v57
    %v79 = vpop.f32.mrf.mxu0
    %v80 = vadd.f32 %v50, %v79
    %81 = vdwg.mxu0
    %v82 = vmax.f32 %v77, 0.0
    %v83 = vmax.f32 %v80, 0.0
    %v84 = vld [vmem:[%s3] sm:$0xff]
    %v85 = vld [vmem:[%s3 + $0x8] sm:$0xff]
    %v86 = vld [vmem:[%s3 + $0x10] sm:$0xff]
    %v87 = vld [vmem:[%s3 + $0x18] sm:$0xff]
    %v88 = vld [vmem:[%s3 + $0x20] sm:$0xff]
    %v89 = vld [vmem:[%s3 + $0x28] sm:$0xff]
    %v90 = vld [vmem:[%s3 + $0x30] sm:$0xff]
    %v91 = vld [vmem:[%s3 + $0x38] sm:$0xff]
    %v92 = vld [vmem:[%s4] sm:$0x1]
    %v94 = vperm.slane %v92, 0
    %vm96 = vcmask 523264
    %v98 = vsel %vm96, %v82, 0
    %v101 = vsel %vm96, %v83, 0
    %103 = vmatpush.msra.mxu0 0.0
    %104 = vmatpush.msra.mxu0 0.0
    %105 = vmatpush.msra.mxu0 0.0
    %106 = vmatpush.msra.mxu0 0.0
    %107 = vmatpush.msra.mxu0 0.0
    %108 = vmatpush.msra.mxu0 0.0
    %109 = vmatpush.msra.mxu0 0.0
    %110 = vmatpush.msra.mxu0 0.0
    %111 = vmatpush.msra.mxu0 %v91
    %112 = vmatpush.msra.mxu0 %v90
    %113 = vmatpush.msra.mxu0 %v89
    %114 = vmatpush.msra.mxu0 %v88
    %115 = vmatpush.msra.mxu0 %v87
    %116 = vmatpush.msra.mxu0 %v86
    %117 = vmatpush.msra.mxu0 %v85
    %118 = vmatpush.msra.mxu0 %v84
    %119 = vmatmul.f32.gmra.mxu0 %v98
    %v120 = vpop.f32.mrf.mxu0
    %v121 = vadd.f32 %v94, %v120
    %122 = vmatmul.f32.gmra.mxu0 %v101
    %v123 = vpop.f32.mrf.mxu0
    %v124 = vadd.f32 %v94, %v123
    %125 = vdwg.mxu0
    %v126 = vmax.f32 %v121, 0.0
    %v127 = vmax.f32 %v124, 0.0
    %v128 = vld [vmem:[%s5] sm:$0xff]
    %v129 = vld [vmem:[%s5 + $0x8] sm:$0xff]
    %v130 = vld [vmem:[%s5 + $0x10] sm:$0xff]
    %v131 = vld [vmem:[%s5 + $0x18] sm:$0xff]
    %v132 = vld [vmem:[%s5 + $0x20] sm:$0xff]
    %v133 = vld [vmem:[%s5 + $0x28] sm:$0xff]
    %v134 = vld [vmem:[%s5 + $0x30] sm:$0xff]
    %v135 = vld [vmem:[%s5 + $0x38] sm:$0xff]
    %v136 = vld [vmem:[%s6] sm:$0x1]
    %v138 = vperm.slane %v136, 0
    %v141 = vsel %vm96, %v126, 0
    %v144 = vsel %vm96, %v127, 0
    %146 = vmatpush.msra.mxu0 0.0
    %147 = vmatpush.msra.mxu0 0.0
    %148 = vmatpush.msra.mxu0 0.0
    %149 = vmatpush.msra.mxu0 0.0
    %150 = vmatpush.msra.mxu0 0.0
    %151 = vmatpush.msra.mxu0 0.0
    %152 = vmatpush.msra.mxu0 0.0
    %153 = vmatpush.msra.mxu0 0.0
    %154 = vmatpush.msra.mxu0 %v135
    %155 = vmatpush.msra.mxu0 %v134
    %156 = vmatpush.msra.mxu0 %v133
    %157 = vmatpush.msra.mxu0 %v132
    %158 = vmatpush.msra.mxu0 %v131
    %159 = vmatpush.msra.mxu0 %v130
    %160 = vmatpush.msra.mxu0 %v129
    %161 = vmatpush.msra.mxu0 %v128
    %162 = vmatmul.f32.gmra.mxu0 %v141
    %v163 = vpop.f32.mrf.mxu0
    %v164 = vadd.f32 %v138, %v163
    %165 = vmatmul.f32.gmra.mxu0 %v144
    %v166 = vpop.f32.mrf.mxu0
    %v167 = vadd.f32 %v138, %v166
    %168 = vdwg.mxu0
    %vm169 = vcmask 130048
    %170 = vst.msk [vmem:[%s7] sm:$0xff] %vm169, %v164
    %171 = vst.msk [vmem:[%s7 + $0x8] sm:$0xff] %vm169, %v167
    // Predicated region
    $region34: #{ournet_forward.1} parent=1 // pred_check
      _
    $region35: #{ournet_forward.1} parent=1 // pred_check_branch
      %173 = sbr.rel (0) target = $region37
    $region36: #{ournet_forward.1} parent=1 // pred_region
      _
    $region37: #{ournet_forward.1} parent=1 // pred_fallthru
      _
    // Predicated region
    $region38: #{ournet_forward.1} parent=1 // pred_check
      _
    $region39: #{ournet_forward.1} parent=1 // pred_check_branch
      %175 = sbr.rel (0) target = $region41
    $region40: #{ournet_forward.1} parent=1 // pred_region
      _
    $region41: #{ournet_forward.1} parent=1 // pred_fallthru
      _
    %176 = vsyncpa [#allocation3], 1

</llo_original>
